<compile_context>
chip_gen: v7x
topology: tpu7x:2x2x1
jax: 0.10.0
libtpu: 0.0.40
codegen_flags: <defaults>
</compile_context>

<pallas_src>
import functools

import jax
import jax.numpy as jnp
from jax.experimental import pallas as pl
from jax.experimental.pallas import tpu as pltpu


def _textcnn_kernel(filter_sizes, emb_ref, wc_ref, bc_ref, wfc_ref, bfc_ref, out_ref):
    """One batch tile.

    emb_ref : [TB, S, E]        bf16  embedded tokens for this batch tile
    wc_ref  : [max_fs, E, Fp]   bf16  conv weights, filter axis packed + zero-padded to Fp lanes
    bc_ref  : [1, Fp]           f32   packed conv biases
    wfc_ref : [NF, Fp, Op]      f32   FC weight split per conv branch (zero rows elsewhere)
    bfc_ref : [1, Op]           f32   FC bias, zero-padded to Op lanes
    out_ref : [TB, Op]          f32   lane-dense output slab (real logits in [:, :O])
    """
    emb = emb_ref[...]
    TB, S, E = emb.shape
    max_fs = wc_ref.shape[0]
    Fp = wc_ref.shape[2]

    # One wide, lane-dense MXU matmul per shift over the FULL sequence; the shift is
    # applied to the narrow [TB, S, Fp] result below, keeping the MXU input contiguous.
    emb2d = emb.reshape(TB * S, E)
    y = [
        jnp.dot(emb2d, wc_ref[i], preferred_element_type=jnp.float32).reshape(TB, S, Fp)
        for i in range(max_fs)
    ]

    bconv = bc_ref[...]  # [1, Fp] f32
    out = jnp.zeros((TB, out_ref.shape[1]), jnp.float32)
    for k, fs in enumerate(filter_sizes):
        L = S - fs + 1  # valid-conv output length
        acc = y[0][:, 0:L, :]
        for i in range(1, fs):
            acc = acc + y[i][:, i:i + L, :]
        # max-pool over time FIRST, then bias + ReLU (both monotone -> order commutes).
        pooled = jnp.maximum(jnp.max(acc, axis=1) + bconv, 0.0)  # [TB, Fp]
        # FC as a sum of per-branch dots: zero rows in wfc_ref[k] kill the padded /
        # garbage lanes, so no lane-axis concat or sub-128 slicing is needed.
        out = out + jnp.dot(pooled, wfc_ref[k], preferred_element_type=jnp.float32)

    # TODO(synk): Dropout is identity in eval mode; no stochastic masking applied.
    out_ref[...] = out + bfc_ref[...]


def textcnn_forward(embedded, conv_params, fc_w, fc_b, filter_sizes, batch_tile=128):
    """embedded: [B, S, E] f32; conv_params: list of (w [fs, E, F], b [1, F])."""
    filter_sizes = tuple(int(fs) for fs in filter_sizes)
    B, S, E = embedded.shape
    F = conv_params[0][0].shape[-1]
    NF = len(filter_sizes)
    O = fc_w.shape[1]
    max_fs = max(filter_sizes)

    Fp = 128 * pl.cdiv(NF * F, 128)   # lane-dense packed filter width
    Op = 128 * pl.cdiv(O, 128)        # lane-dense output width

    # Pack all conv weights/biases into one [max_fs, E, Fp] block (zero-padded columns).
    w_packed = jnp.zeros((max_fs, E, Fp), jnp.float32)
    b_packed = jnp.zeros((1, Fp), jnp.float32)
    for k, ((w, b), fs) in enumerate(zip(conv_params, filter_sizes)):
        w_packed = w_packed.at[:fs, :, k * F:(k + 1) * F].set(w)
        b_packed = b_packed.at[:, k * F:(k + 1) * F].set(b)

    # Split FC weight per branch, zero rows outside that branch's filters.
    wfc_packed = jnp.zeros((NF, Fp, Op), jnp.float32)
    for k in range(NF):
        wfc_packed = wfc_packed.at[k, k * F:(k + 1) * F, :O].set(fc_w[k * F:(k + 1) * F, :])
    bfc_packed = jnp.zeros((1, Op), jnp.float32).at[:, :O].set(fc_b)

    # bf16 MXU inputs (f32 accumulation) halve HBM traffic for the dominant operand.
    emb_bf16 = embedded.astype(jnp.bfloat16)
    w_packed = w_packed.astype(jnp.bfloat16)

    # Batch grid for DMA/compute pipelining.  TB kept modest so two input buffers +
    # per-tile activations stay well inside v7x's 64 MiB VMEM (halve batch_tile for
    # long sequences).
    TB = min(batch_tile, B)
    n_tiles = pl.cdiv(B, TB)
    Bp = n_tiles * TB
    if Bp != B:
        emb_bf16 = jnp.pad(emb_bf16, ((0, Bp - B), (0, 0), (0, 0)))

    kernel = functools.partial(_textcnn_kernel, filter_sizes)
    out = pl.pallas_call(
        kernel,
        out_shape=jax.ShapeDtypeStruct((Bp, Op), jnp.float32),
        grid=(n_tiles,),
        in_specs=[
            pl.BlockSpec((TB, S, E), lambda i: (i, 0, 0)),
            pl.BlockSpec((max_fs, E, Fp), lambda i: (0, 0, 0)),
            pl.BlockSpec((1, Fp), lambda i: (0, 0)),
            pl.BlockSpec((NF, Fp, Op), lambda i: (0, 0, 0)),
            pl.BlockSpec((1, Op), lambda i: (0, 0)),
        ],
        out_specs=pl.BlockSpec((TB, Op), lambda i: (i, 0)),
        compiler_params=pltpu.CompilerParams(
            dimension_semantics=("parallel",),     # shard batch tiles across v7x's 2 TCs
            vmem_limit_bytes=48 * 1024 * 1024,     # explicit scoped-VMEM limit (v5e default is 16 MiB)
        ),
    )(emb_bf16, w_packed, b_packed, wfc_packed, bfc_packed)

    return out[:B, :O]


def _reference_forward(embedded, conv_params, fc_w, fc_b, filter_sizes):
    """Pure-JAX f32 reference mirroring the PyTorch forward (eval mode)."""
    B, S, E = embedded.shape
    pooled = []
    for (w, b), fs in zip(conv_params, filter_sizes):
        L = S - fs + 1
        acc = jnp.zeros((B, L, w.shape[-1]), jnp.float32)
        for i in range(fs):
            acc = acc + jnp.einsum("ble,ef->blf", embedded[:, i:i + L, :], w[i])
        acc = jnp.maximum(acc + b[None, :, :], 0.0)
        pooled.append(jnp.max(acc, axis=1))
    cat = jnp.concatenate(pooled, axis=-1)
    return cat @ fc_w + fc_b


if __name__ == "__main__":
    # Small, module-consistent shapes.
    vocab_size = 50
    embedding_dim = 32
    n_filters = 8
    filter_sizes = (2, 3, 4)
    output_dim = 3
    pad_idx = 0
    batch = 2
    seq_len = 16

    key = jax.random.PRNGKey(0)
    k_emb, k_text, k_fc_w, k_fc_b, *k_convs = jax.random.split(
        key, 4 + 2 * len(filter_sizes)
    )

    # Deterministic parameter init (synthetic; not a checkpoint load).
    emb_table = 0.1 * jax.random.normal(
        k_emb, (vocab_size, embedding_dim), dtype=jnp.float32
    )
    emb_table = emb_table.at[pad_idx].set(0.0)  # padding_idx row is zero

    conv_params = []
    for i, fs in enumerate(filter_sizes):
        w = 0.1 * jax.random.normal(
            k_convs[2 * i], (fs, embedding_dim, n_filters), dtype=jnp.float32
        )
        b = 0.1 * jax.random.normal(
            k_convs[2 * i + 1], (1, n_filters), dtype=jnp.float32
        )
        conv_params.append((w, b))

    fc_w = 0.1 * jax.random.normal(
        k_fc_w, (len(filter_sizes) * n_filters, output_dim), dtype=jnp.float32
    )
    fc_b = 0.1 * jax.random.normal(k_fc_b, (1, output_dim), dtype=jnp.float32)

    # Input token ids and embedding lookup.
    # TODO(synk): embedding gather stays in XLA glue (jnp.take); could be fused into the
    # kernel via PrefetchScalarGridSpec + per-row DMA to avoid materializing [B,S,E] in HBM.
    text = jax.random.randint(k_text, (batch, seq_len), 0, vocab_size, dtype=jnp.int32)
    embedded = jnp.take(emb_table, text, axis=0)  # [B, S, E]

    out = jax.block_until_ready(
        textcnn_forward(embedded, conv_params, fc_w, fc_b, filter_sizes)
    )

    ref = _reference_forward(embedded, conv_params, fc_w, fc_b, filter_sizes)
    assert out.shape == (batch, output_dim)
    # Tolerance loosened for bf16 conv inputs (accumulation stays f32 inside the kernel).
    assert jnp.allclose(out, ref, atol=2e-2, rtol=2e-2), "mismatch vs JAX reference"

    print("KERNEL_OK")
</pallas_src>

<mosaic_0001>
module attributes {stable_mosaic.version = 11 : i64} {
  func.func @_textcnn_kernel(%arg0: i32, %arg1: memref<2x16x32xbf16, #tpu.memory_space<vmem>>, %arg2: memref<4x32x128xbf16, #tpu.memory_space<vmem>>, %arg3: memref<1x128xf32, #tpu.memory_space<vmem>>, %arg4: memref<3x128x128xf32, #tpu.memory_space<vmem>>, %arg5: memref<1x128xf32, #tpu.memory_space<vmem>>, %arg6: memref<2x128xf32, #tpu.memory_space<vmem>>) attributes {dimension_semantics = [#tpu.dimension_semantics<parallel>], iteration_bounds = array<i64: 1>, scalar_prefetch = 0 : i64, scratch_operands = 0 : i64, tpu.core_type = #tpu.core_type<tc>, window_params = [{transform_indices = @transform_0, window_bounds = array<i64: 2, 16, 32>}, {pipeline_mode = #tpu.pipeline_mode<synchronous>, transform_indices = @transform_1, window_bounds = array<i64: 4, 32, 128>}, {pipeline_mode = #tpu.pipeline_mode<synchronous>, transform_indices = @transform_2, window_bounds = array<i64: 1, 128>}, {pipeline_mode = #tpu.pipeline_mode<synchronous>, transform_indices = @transform_3, window_bounds = array<i64: 3, 128, 128>}, {pipeline_mode = #tpu.pipeline_mode<synchronous>, transform_indices = @transform_4, window_bounds = array<i64: 1, 128>}, {transform_indices = @transform_5, window_bounds = array<i64: 2, 128>}]} {
    %c0 = arith.constant 0 : index
    %c0_0 = arith.constant 0 : index
    %c0_1 = arith.constant 0 : index
    %0 = vector.load %arg1[%c0, %c0_0, %c0_1] : memref<2x16x32xbf16, #tpu.memory_space<vmem>>, vector<2x16x32xbf16>
    %1 = vector.shape_cast %0 : vector<2x16x32xbf16> to vector<32x32xbf16>
    %c0_2 = arith.constant 0 : index
    %c0_3 = arith.constant 0 : index
    %c0_4 = arith.constant 0 : index
    %2 = vector.load %arg2[%c0_2, %c0_3, %c0_4] : memref<4x32x128xbf16, #tpu.memory_space<vmem>>, vector<1x32x128xbf16>
    %3 = vector.shape_cast %2 : vector<1x32x128xbf16> to vector<32x128xbf16>
    %cst = arith.constant dense<0.000000e+00> : vector<32x128xf32>
    %4 = tpu.matmul %1, %3, %cst {dimension_numbers = #tpu.dot_dimension_numbers<[1], [0], [0], [1], [0, 0, 1, 1], [], []>} : vector<32x32xbf16>, vector<32x128xbf16>, vector<32x128xf32> -> vector<32x128xf32>
    %5 = vector.shape_cast %4 : vector<32x128xf32> to vector<2x16x128xf32>
    %c1 = arith.constant 1 : index
    %c0_5 = arith.constant 0 : index
    %c0_6 = arith.constant 0 : index
    %6 = vector.load %arg2[%c1, %c0_5, %c0_6] : memref<4x32x128xbf16, #tpu.memory_space<vmem>>, vector<1x32x128xbf16>
    %7 = vector.shape_cast %6 : vector<1x32x128xbf16> to vector<32x128xbf16>
    %cst_7 = arith.constant dense<0.000000e+00> : vector<32x128xf32>
    %8 = tpu.matmul %1, %7, %cst_7 {dimension_numbers = #tpu.dot_dimension_numbers<[1], [0], [0], [1], [0, 0, 1, 1], [], []>} : vector<32x32xbf16>, vector<32x128xbf16>, vector<32x128xf32> -> vector<32x128xf32>
    %9 = vector.shape_cast %8 : vector<32x128xf32> to vector<2x16x128xf32>
    %c2 = arith.constant 2 : index
    %c0_8 = arith.constant 0 : index
    %c0_9 = arith.constant 0 : index
    %10 = vector.load %arg2[%c2, %c0_8, %c0_9] : memref<4x32x128xbf16, #tpu.memory_space<vmem>>, vector<1x32x128xbf16>
    %11 = vector.shape_cast %10 : vector<1x32x128xbf16> to vector<32x128xbf16>
    %cst_10 = arith.constant dense<0.000000e+00> : vector<32x128xf32>
    %12 = tpu.matmul %1, %11, %cst_10 {dimension_numbers = #tpu.dot_dimension_numbers<[1], [0], [0], [1], [0, 0, 1, 1], [], []>} : vector<32x32xbf16>, vector<32x128xbf16>, vector<32x128xf32> -> vector<32x128xf32>
    %13 = vector.shape_cast %12 : vector<32x128xf32> to vector<2x16x128xf32>
    %c3 = arith.constant 3 : index
    %c0_11 = arith.constant 0 : index
    %c0_12 = arith.constant 0 : index
    %14 = vector.load %arg2[%c3, %c0_11, %c0_12] : memref<4x32x128xbf16, #tpu.memory_space<vmem>>, vector<1x32x128xbf16>
    %15 = vector.shape_cast %14 : vector<1x32x128xbf16> to vector<32x128xbf16>
    %cst_13 = arith.constant dense<0.000000e+00> : vector<32x128xf32>
    %16 = tpu.matmul %1, %15, %cst_13 {dimension_numbers = #tpu.dot_dimension_numbers<[1], [0], [0], [1], [0, 0, 1, 1], [], []>} : vector<32x32xbf16>, vector<32x128xbf16>, vector<32x128xf32> -> vector<32x128xf32>
    %17 = vector.shape_cast %16 : vector<32x128xf32> to vector<2x16x128xf32>
    %c0_14 = arith.constant 0 : index
    %c0_15 = arith.constant 0 : index
    %18 = vector.load %arg3[%c0_14, %c0_15] : memref<1x128xf32, #tpu.memory_space<vmem>>, vector<1x128xf32>
    %cst_16 = arith.constant 0.000000e+00 : f32
    %19 = vector.broadcast %cst_16 : f32 to vector<2x128xf32>
    %20 = vector.extract_strided_slice %5 {offsets = [0, 0, 0], sizes = [2, 15, 128], strides = [1, 1, 1]} : vector<2x16x128xf32> to vector<2x15x128xf32>
    %21 = vector.extract_strided_slice %9 {offsets = [0, 1, 0], sizes = [2, 15, 128], strides = [1, 1, 1]} : vector<2x16x128xf32> to vector<2x15x128xf32>
    %22 = arith.addf %20, %21 : vector<2x15x128xf32>
    %cst_17 = arith.constant dense<0xFF800000> : vector<2x128xf32>
    %23 = vector.multi_reduction <maximumf>, %22, %cst_17 [1] : vector<2x15x128xf32> to vector<2x128xf32>
    %24 = vector.broadcast %18 : vector<1x128xf32> to vector<2x128xf32>
    %25 = arith.addf %23, %24 : vector<2x128xf32>
    %cst_18 = arith.constant 0.000000e+00 : f32
    %26 = vector.broadcast %cst_18 : f32 to vector<2x128xf32>
    %27 = arith.maximumf %25, %26 : vector<2x128xf32>
    %c0_19 = arith.constant 0 : index
    %c0_20 = arith.constant 0 : index
    %c0_21 = arith.constant 0 : index
    %28 = vector.load %arg4[%c0_19, %c0_20, %c0_21] : memref<3x128x128xf32, #tpu.memory_space<vmem>>, vector<1x128x128xf32>
    %29 = vector.shape_cast %28 : vector<1x128x128xf32> to vector<128x128xf32>
    %cst_22 = arith.constant dense<0.000000e+00> : vector<2x128xf32>
    %30 = tpu.matmul %27, %29, %cst_22 {dimension_numbers = #tpu.dot_dimension_numbers<[1], [0], [0], [1], [0, 0, 1, 1], [], []>} : vector<2x128xf32>, vector<128x128xf32>, vector<2x128xf32> -> vector<2x128xf32>
    %31 = arith.addf %19, %30 : vector<2x128xf32>
    %32 = vector.extract_strided_slice %5 {offsets = [0, 0, 0], sizes = [2, 14, 128], strides = [1, 1, 1]} : vector<2x16x128xf32> to vector<2x14x128xf32>
    %33 = vector.extract_strided_slice %9 {offsets = [0, 1, 0], sizes = [2, 14, 128], strides = [1, 1, 1]} : vector<2x16x128xf32> to vector<2x14x128xf32>
    %34 = arith.addf %32, %33 : vector<2x14x128xf32>
    %35 = vector.extract_strided_slice %13 {offsets = [0, 2, 0], sizes = [2, 14, 128], strides = [1, 1, 1]} : vector<2x16x128xf32> to vector<2x14x128xf32>
    %36 = arith.addf %34, %35 : vector<2x14x128xf32>
    %cst_23 = arith.constant dense<0xFF800000> : vector<2x128xf32>
    %37 = vector.multi_reduction <maximumf>, %36, %cst_23 [1] : vector<2x14x128xf32> to vector<2x128xf32>
    %38 = vector.broadcast %18 : vector<1x128xf32> to vector<2x128xf32>
    %39 = arith.addf %37, %38 : vector<2x128xf32>
    %cst_24 = arith.constant 0.000000e+00 : f32
    %40 = vector.broadcast %cst_24 : f32 to vector<2x128xf32>
    %41 = arith.maximumf %39, %40 : vector<2x128xf32>
    %c1_25 = arith.constant 1 : index
    %c0_26 = arith.constant 0 : index
    %c0_27 = arith.constant 0 : index
    %42 = vector.load %arg4[%c1_25, %c0_26, %c0_27] : memref<3x128x128xf32, #tpu.memory_space<vmem>>, vector<1x128x128xf32>
    %43 = vector.shape_cast %42 : vector<1x128x128xf32> to vector<128x128xf32>
    %cst_28 = arith.constant dense<0.000000e+00> : vector<2x128xf32>
    %44 = tpu.matmul %41, %43, %cst_28 {dimension_numbers = #tpu.dot_dimension_numbers<[1], [0], [0], [1], [0, 0, 1, 1], [], []>} : vector<2x128xf32>, vector<128x128xf32>, vector<2x128xf32> -> vector<2x128xf32>
    %45 = arith.addf %31, %44 : vector<2x128xf32>
    %46 = vector.extract_strided_slice %5 {offsets = [0, 0, 0], sizes = [2, 13, 128], strides = [1, 1, 1]} : vector<2x16x128xf32> to vector<2x13x128xf32>
    %47 = vector.extract_strided_slice %9 {offsets = [0, 1, 0], sizes = [2, 13, 128], strides = [1, 1, 1]} : vector<2x16x128xf32> to vector<2x13x128xf32>
    %48 = arith.addf %46, %47 : vector<2x13x128xf32>
    %49 = vector.extract_strided_slice %13 {offsets = [0, 2, 0], sizes = [2, 13, 128], strides = [1, 1, 1]} : vector<2x16x128xf32> to vector<2x13x128xf32>
    %50 = arith.addf %48, %49 : vector<2x13x128xf32>
    %51 = vector.extract_strided_slice %17 {offsets = [0, 3, 0], sizes = [2, 13, 128], strides = [1, 1, 1]} : vector<2x16x128xf32> to vector<2x13x128xf32>
    %52 = arith.addf %50, %51 : vector<2x13x128xf32>
    %cst_29 = arith.constant dense<0xFF800000> : vector<2x128xf32>
    %53 = vector.multi_reduction <maximumf>, %52, %cst_29 [1] : vector<2x13x128xf32> to vector<2x128xf32>
    %54 = vector.broadcast %18 : vector<1x128xf32> to vector<2x128xf32>
    %55 = arith.addf %53, %54 : vector<2x128xf32>
    %cst_30 = arith.constant 0.000000e+00 : f32
    %56 = vector.broadcast %cst_30 : f32 to vector<2x128xf32>
    %57 = arith.maximumf %55, %56 : vector<2x128xf32>
    %c2_31 = arith.constant 2 : index
    %c0_32 = arith.constant 0 : index
    %c0_33 = arith.constant 0 : index
    %58 = vector.load %arg4[%c2_31, %c0_32, %c0_33] : memref<3x128x128xf32, #tpu.memory_space<vmem>>, vector<1x128x128xf32>
    %59 = vector.shape_cast %58 : vector<1x128x128xf32> to vector<128x128xf32>
    %cst_34 = arith.constant dense<0.000000e+00> : vector<2x128xf32>
    %60 = tpu.matmul %57, %59, %cst_34 {dimension_numbers = #tpu.dot_dimension_numbers<[1], [0], [0], [1], [0, 0, 1, 1], [], []>} : vector<2x128xf32>, vector<128x128xf32>, vector<2x128xf32> -> vector<2x128xf32>
    %61 = arith.addf %45, %60 : vector<2x128xf32>
    %c0_35 = arith.constant 0 : index
    %c0_36 = arith.constant 0 : index
    %62 = vector.load %arg5[%c0_35, %c0_36] : memref<1x128xf32, #tpu.memory_space<vmem>>, vector<1x128xf32>
    %63 = vector.broadcast %62 : vector<1x128xf32> to vector<2x128xf32>
    %64 = arith.addf %61, %63 : vector<2x128xf32>
    %c0_37 = arith.constant 0 : index
    %c0_38 = arith.constant 0 : index
    %65 = vector.load %arg6[%c0_37, %c0_38] : memref<2x128xf32, #tpu.memory_space<vmem>>, vector<2x128xf32>
    tpu.vector_store %arg6[%c0_37, %c0_38], %64 {strides = array<i32>} : memref<2x128xf32, #tpu.memory_space<vmem>>, vector<2x128xf32>,
    return
  }
  func.func @transform_0(%arg0: i32) -> (i32, i32, i32) {
    %c0_i32 = arith.constant 0 : i32
    %c0_i32_0 = arith.constant 0 : i32
    %c0_i32_1 = arith.constant 0 : i32
    return %arg0, %c0_i32, %c0_i32_0 : i32, i32, i32
  }
  func.func @transform_1(%arg0: i32) -> (i32, i32, i32) {
    %c0_i32 = arith.constant 0 : i32
    %c0_i32_0 = arith.constant 0 : i32
    %c0_i32_1 = arith.constant 0 : i32
    %c0_i32_2 = arith.constant 0 : i32
    return %c0_i32, %c0_i32_0, %c0_i32_1 : i32, i32, i32
  }
  func.func @transform_2(%arg0: i32) -> (i32, i32) {
    %c0_i32 = arith.constant 0 : i32
    %c0_i32_0 = arith.constant 0 : i32
    %c0_i32_1 = arith.constant 0 : i32
    return %c0_i32, %c0_i32_0 : i32, i32
  }
  func.func @transform_3(%arg0: i32) -> (i32, i32, i32) {
    %c0_i32 = arith.constant 0 : i32
    %c0_i32_0 = arith.constant 0 : i32
    %c0_i32_1 = arith.constant 0 : i32
    %c0_i32_2 = arith.constant 0 : i32
    return %c0_i32, %c0_i32_0, %c0_i32_1 : i32, i32, i32
  }
  func.func @transform_4(%arg0: i32) -> (i32, i32) {
    %c0_i32 = arith.constant 0 : i32
    %c0_i32_0 = arith.constant 0 : i32
    %c0_i32_1 = arith.constant 0 : i32
    return %c0_i32, %c0_i32_0 : i32, i32
  }
  func.func @transform_5(%arg0: i32) -> (i32, i32) {
    %c0_i32 = arith.constant 0 : i32
    %c0_i32_0 = arith.constant 0 : i32
    return %arg0, %c0_i32 : i32, i32
  }
}

</mosaic_0001>

<llo_original>
// kernel: tpu_custom_call.1
$region0: #{tpu_custom_call.1}
  #allocation0 [shape = 'u32[]', space=smem, size = 0x4, offset = 0x4, fixed_abs, tag = 'smem constant byte address 0x4 - core index']
  #allocation1 [shape = 'u32[144,128]{1,0:T(1,128)}', space=vmem, size = 0x12000, scoped, tag = 'internal scratch']
  %s0 = inlined_call_operand.hbm [shape: bf16[2,16,32], index: 0, kind: input, shape index: {}]
  %s1 = inlined_call_operand.hbm [shape: bf16[4,32,128], index: 1, kind: input, shape index: {}]
  %s2 = inlined_call_operand.vmem [shape: f32[1,128], index: 2, kind: input, shape index: {}]
  %s3 = inlined_call_operand.hbm [shape: f32[3,128,128], index: 3, kind: input, shape index: {}]
  %s4 = inlined_call_operand.vmem [shape: f32[1,128], index: 4, kind: input, shape index: {}]
  %s5 = inlined_call_operand.hbm [shape: f32[2,128], index: 5, kind: output, shape index: {}]
  %s6 = sld [smem:[#allocation0]]
  $region42: #{tpu_custom_call.1} parent=0
    _
  %s8 = ssub.s32 1, %s6
  %s9 = scalar_select 0, %s8, %s6
  $region1: #{tpu_custom_call.1} parent=0
    #allocation2 [shape = 'u8[8192]{0}', space=vmem, size = 0x2000, scoped, tag = 'input window, operand 0, single buffered']
    #allocation3 [shape = 's32[1]{0}', space=sflag, size = 0x4, scoped, tag = 'scoped memory for tpu_custom_call.1']
    #allocation4 [shape = 's32[1]{0}', space=sflag, size = 0x4, scoped, tag = 'scoped memory for tpu_custom_call.1']
    #allocation5 [shape = 'u8[32768]{0}', space=vmem, size = 0x8000, scoped, tag = 'input window, operand 1, single buffered']
    #allocation6 [shape = 's32[1]{0}', space=sflag, size = 0x4, scoped, tag = 'scoped memory for tpu_custom_call.1']
    #allocation7 [shape = 'u8[196608]{0}', space=vmem, size = 0x30000, scoped, tag = 'input window, operand 3, single buffered']
    #allocation8 [shape = 'u8[1024]{0}', space=vmem, size = 0x400, scoped, tag = 'output window, operand 0, single buffered']
    %10 = vsyncpa [#allocation3], 0
    %11 = vsyncpa [#allocation6], 0
    %12 = vsyncpa [#allocation4], 0
    // Predicated region
    $region2: #{tpu_custom_call.1} parent=1 // pred_check
      _
    $region3: #{tpu_custom_call.1} parent=1 // pred_check_branch
      %14 = sbr.rel (0) target = $region5
    $region4: #{tpu_custom_call.1} parent=1 // pred_region
      %s16 = ssub.s32 256, 256
      %17 = vsyncadd [#allocation3], %s16
      %s18 = sshll.u32 [#allocation2], 4
      %s19 = int_to_ptr.vmem [resolvable:$true] %s18
      %24 = dma.hbm_to_vmem [thread:$0]  %s0, 256, %s19, [#allocation3], 64, 64, 4
    $region5: #{tpu_custom_call.1} parent=1 // pred_fallthru
      _
    // Predicated region
    $region6: #{tpu_custom_call.1} parent=1 // pred_check
      _
    $region7: #{tpu_custom_call.1} parent=1 // pred_check_branch
      %26 = sbr.rel (0) target = $region9
    $region8: #{tpu_custom_call.1} parent=1 // pred_region
      %s28 = ssub.s32 1024, 1024
      %29 = vsyncadd [#allocation6], %s28
      %s30 = sshll.u32 [#allocation5], 4
      %s31 = int_to_ptr.vmem [resolvable:$true] %s30
      %36 = dma.hbm_to_vmem [thread:$0]  %s1, 1024, %s31, [#allocation6], 64, 64, 4
    $region9: #{tpu_custom_call.1} parent=1 // pred_fallthru
      _
    // Predicated region
    $region10: #{tpu_custom_call.1} parent=1 // pred_check
      _
    $region11: #{tpu_custom_call.1} parent=1 // pred_check_branch
      %38 = sbr.rel (0) target = $region13
    $region12: #{tpu_custom_call.1} parent=1 // pred_region
      _
    $region13: #{tpu_custom_call.1} parent=1 // pred_fallthru
      _
    // Predicated region
    $region14: #{tpu_custom_call.1} parent=1 // pred_check
      _
    $region15: #{tpu_custom_call.1} parent=1 // pred_check_branch
      %40 = sbr.rel (0) target = $region17
    $region16: #{tpu_custom_call.1} parent=1 // pred_region
      %s42 = ssub.s32 6144, 6144
      %43 = vsyncadd [#allocation6], %s42
      %s44 = sshll.u32 [#allocation7], 4
      %s45 = int_to_ptr.vmem [resolvable:$true] %s44
      %50 = dma.hbm_to_vmem [thread:$0]  %s3, 6144, %s45, [#allocation6], 128, 128, 8
    $region17: #{tpu_custom_call.1} parent=1 // pred_fallthru
      _
    // Predicated region
    $region18: #{tpu_custom_call.1} parent=1 // pred_check
      _
    $region19: #{tpu_custom_call.1} parent=1 // pred_check_branch
      %52 = sbr.rel (0) target = $region21
    $region20: #{tpu_custom_call.1} parent=1 // pred_region
      _
    $region21: #{tpu_custom_call.1} parent=1 // pred_fallthru
      _
    // Predicated region
    $region22: #{tpu_custom_call.1} parent=1 // pred_check
      _
    $region23: #{tpu_custom_call.1} parent=1 // pred_check_branch
      %54 = sbr.rel (0) target = $region25
    $region24: #{tpu_custom_call.1} parent=1 // pred_region
      %55 = dma.done [#allocation3], 256
    $region25: #{tpu_custom_call.1} parent=1 // pred_fallthru
      _
    // Predicated region
    $region26: #{tpu_custom_call.1} parent=1 // pred_check
      _
    $region27: #{tpu_custom_call.1} parent=1 // pred_check_branch
      %57 = sbr.rel (0) target = $region29
    $region28: #{tpu_custom_call.1} parent=1 // pred_region
      %58 = dma.done [#allocation6], 1024
    $region29: #{tpu_custom_call.1} parent=1 // pred_fallthru
      _
    // Predicated region
    $region30: #{tpu_custom_call.1} parent=1 // pred_check
      _
    $region31: #{tpu_custom_call.1} parent=1 // pred_check_branch
      %60 = sbr.rel (0) target = $region33
    $region32: #{tpu_custom_call.1} parent=1 // pred_region
      %61 = dma.done [#allocation6], 6144
    $region33: #{tpu_custom_call.1} parent=1 // pred_fallthru
      _
    %v63 = vld [vmem:[#allocation2] sm:$0xf]
    %v64 = vld [vmem:[#allocation2 + $0x4] sm:$0xf]
    %v65 = vld [vmem:[#allocation2 + $0x8] sm:$0xf]
    %v66 = vld [vmem:[#allocation2 + $0xc] sm:$0xf]
    %v67 = vld [vmem:[#allocation5] sm:$0xf]
    %v68 = vld [vmem:[#allocation5 + $0x4] sm:$0xf]
    %v69 = vld [vmem:[#allocation5 + $0x8] sm:$0xf]
    %v70 = vld [vmem:[#allocation5 + $0xc] sm:$0xf]
    %v75 = vunpack.c.l.b16 %v63
    %v76 = vunpack.c.l.b16 %v64
    %v77 = vunpack.c.l.b16 %v65
    %v78 = vunpack.c.l.b16 %v66
    %v79 = vpack.c.b16 %v76, %v75
    %v80 = vpack.c.b16 %v78, %v77
    %v85 = vunpack.c.l.b16 %v67
    %v86 = vunpack.c.l.b16 %v68
    %v87 = vunpack.c.l.b16 %v69
    %v88 = vunpack.c.l.b16 %v70
    %v89 = vpack.c.b16 %v86, %v85
    %v90 = vpack.c.b16 %v88, %v87
    %vm93 = vcmask 261120
    %v95 = vsel %vm93, %v79, 0
    %v98 = vsel %vm93, %v80, 0
    %100 = vmatprep.subr.bf16.mxu0 0
    %101 = vmatpush1.bf16.msra.mxu0 %v89
    %102 = vmatprep.subr.bf16.mxu0 0
    %103 = vmatpush1.bf16.msra.mxu0 %v90
    %104 = vmatprep.subr.bf16.mxu0 0
    %105 = vmatpush1.bf16.msra.mxu0 0
    %106 = vmatprep.subr.bf16.mxu0 0
    %107 = vmatpush1.bf16.msra.mxu0 0
    %108 = vmatprep.subr.bf16.mxu0 0
    %109 = vmatpush1.bf16.msra.mxu0 0
    %110 = vmatprep.subr.bf16.mxu0 0
    %111 = vmatpush1.bf16.msra.mxu0 0
    %112 = vmatprep.subr.bf16.mxu0 0
    %113 = vmatpush1.bf16.msra.mxu0 0
    %114 = vmatprep.subr.bf16.mxu0 0
    %115 = vmatpush1.bf16.msra.mxu0 0
    %116 = vmatprep.subr.bf16.mxu0 0
    %117 = vmatpush1.bf16.msra.mxu0 0
    %118 = vmatprep.subr.bf16.mxu0 0
    %119 = vmatpush1.bf16.msra.mxu0 0
    %120 = vmatprep.subr.bf16.mxu0 0
    %121 = vmatpush1.bf16.msra.mxu0 0
    %122 = vmatprep.subr.bf16.mxu0 0
    %123 = vmatpush1.bf16.msra.mxu0 0
    %124 = vmatprep.subr.bf16.mxu0 0
    %125 = vmatpush1.bf16.msra.mxu0 0
    %126 = vmatprep.subr.bf16.mxu0 0
    %127 = vmatpush1.bf16.msra.mxu0 0
    %128 = vmatprep.subr.bf16.mxu0 0
    %129 = vmatpush1.bf16.msra.mxu0 0
    %130 = vmatprep.subr.bf16.mxu0 0
    %131 = vmatpush1.bf16.msra.mxu0 0
    %132 = vmatprep.mubr.bf16.mxu0 0
    %133 = vmatmul.mubr.bf16.gmra.mrb[0].mxu0 %v95
    %v134 = vpop.f32.mrb[0].mxu0
    %v135 = vadd.f32 0.0, %v134
    %v136 = vpop.f32.mrb[0].mxu0
    %v137 = vpop.f32.mrb[0].mxu0
    %v138 = vadd.f32 0.0, %v137
    %v139 = vpop.f32.mrb[0].mxu0
    %140 = vmatprep.mubr.bf16.mxu0 0
    %141 = vmatmul.mubr.bf16.gmra.mrb[0].mxu0 %v98
    %v142 = vpop.f32.mrb[0].mxu0
    %v143 = vadd.f32 0.0, %v142
    %v144 = vpop.f32.mrb[0].mxu0
    %v145 = vpop.f32.mrb[0].mxu0
    %v146 = vadd.f32 0.0, %v145
    %v147 = vpop.f32.mrb[0].mxu0
    %148 = vdwg.mxu0
    %s149 = scalar_lea.vmem [#allocation5], 16
    %v150 = vld [vmem:[%s149] sm:$0xf]
    %v151 = vld [vmem:[%s149 + $0x4] sm:$0xf]
    %v152 = vld [vmem:[%s149 + $0x8] sm:$0xf]
    %v153 = vld [vmem:[%s149 + $0xc] sm:$0xf]
    %v158 = vunpack.c.l.b16 %v150
    %v159 = vunpack.c.l.b16 %v151
    %v160 = vunpack.c.l.b16 %v152
    %v161 = vunpack.c.l.b16 %v153
    %v162 = vpack.c.b16 %v159, %v158
    %v163 = vpack.c.b16 %v161, %v160
    %166 = vmatprep.subr.bf16.mxu0 0
    %167 = vmatpush1.bf16.msra.mxu0 %v162
    %168 = vmatprep.subr.bf16.mxu0 0
    %169 = vmatpush1.bf16.msra.mxu0 %v163
    %170 = vmatprep.subr.bf16.mxu0 0
    %171 = vmatpush1.bf16.msra.mxu0 0
    %172 = vmatprep.subr.bf16.mxu0 0
    %173 = vmatpush1.bf16.msra.mxu0 0
    %174 = vmatprep.subr.bf16.mxu0 0
    %175 = vmatpush1.bf16.msra.mxu0 0
    %176 = vmatprep.subr.bf16.mxu0 0
    %177 = vmatpush1.bf16.msra.mxu0 0
    %178 = vmatprep.subr.bf16.mxu0 0
    %179 = vmatpush1.bf16.msra.mxu0 0
    %180 = vmatprep.subr.bf16.mxu0 0
    %181 = vmatpush1.bf16.msra.mxu0 0
    %182 = vmatprep.subr.bf16.mxu0 0
    %183 = vmatpush1.bf16.msra.mxu0 0
    %184 = vmatprep.subr.bf16.mxu0 0
    %185 = vmatpush1.bf16.msra.mxu0 0
    %186 = vmatprep.subr.bf16.mxu0 0
    %187 = vmatpush1.bf16.msra.mxu0 0
    %188 = vmatprep.subr.bf16.mxu0 0
    %189 = vmatpush1.bf16.msra.mxu0 0
    %190 = vmatprep.subr.bf16.mxu0 0
    %191 = vmatpush1.bf16.msra.mxu0 0
    %192 = vmatprep.subr.bf16.mxu0 0
    %193 = vmatpush1.bf16.msra.mxu0 0
    %194 = vmatprep.subr.bf16.mxu0 0
    %195 = vmatpush1.bf16.msra.mxu0 0
    %196 = vmatprep.subr.bf16.mxu0 0
    %197 = vmatpush1.bf16.msra.mxu0 0
    %198 = vmatprep.mubr.bf16.mxu0 0
    %199 = vmatmul.mubr.bf16.gmra.mrb[0].mxu0 %v95
    %v200 = vpop.f32.mrb[0].mxu0
    %v201 = vadd.f32 0.0, %v200
    %v202 = vpop.f32.mrb[0].mxu0
    %v203 = vpop.f32.mrb[0].mxu0
    %v204 = vadd.f32 0.0, %v203
    %v205 = vpop.f32.mrb[0].mxu0
    %206 = vmatprep.mubr.bf16.mxu0 0
    %207 = vmatmul.mubr.bf16.gmra.mrb[0].mxu0 %v98
    %v208 = vpop.f32.mrb[0].mxu0
    %v209 = vadd.f32 0.0, %v208
    %v210 = vpop.f32.mrb[0].mxu0
    %v211 = vpop.f32.mrb[0].mxu0
    %v212 = vadd.f32 0.0, %v211
    %v213 = vpop.f32.mrb[0].mxu0
    %214 = vdwg.mxu0
    %s215 = scalar_lea.vmem [#allocation5], 32
    %v216 = vld [vmem:[%s215] sm:$0xf]
    %v217 = vld [vmem:[%s215 + $0x4] sm:$0xf]
    %v218 = vld [vmem:[%s215 + $0x8] sm:$0xf]
    %v219 = vld [vmem:[%s215 + $0xc] sm:$0xf]
    %v224 = vunpack.c.l.b16 %v216
    %v225 = vunpack.c.l.b16 %v217
    %v226 = vunpack.c.l.b16 %v218
    %v227 = vunpack.c.l.b16 %v219
    %v228 = vpack.c.b16 %v225, %v224
    %v229 = vpack.c.b16 %v227, %v226
    %232 = vmatprep.subr.bf16.mxu0 0
    %233 = vmatpush1.bf16.msra.mxu0 %v228
    %234 = vmatprep.subr.bf16.mxu0 0
    %235 = vmatpush1.bf16.msra.mxu0 %v229
    %236 = vmatprep.subr.bf16.mxu0 0
    %237 = vmatpush1.bf16.msra.mxu0 0
    %238 = vmatprep.subr.bf16.mxu0 0
    %239 = vmatpush1.bf16.msra.mxu0 0
    %240 = vmatprep.subr.bf16.mxu0 0
    %241 = vmatpush1.bf16.msra.mxu0 0
    %242 = vmatprep.subr.bf16.mxu0 0
    %243 = vmatpush1.bf16.msra.mxu0 0
    %244 = vmatprep.subr.bf16.mxu0 0
    %245 = vmatpush1.bf16.msra.mxu0 0
    %246 = vmatprep.subr.bf16.mxu0 0
    %247 = vmatpush1.bf16.msra.mxu0 0
    %248 = vmatprep.subr.bf16.mxu0 0
    %249 = vmatpush1.bf16.msra.mxu0 0
    %250 = vmatprep.subr.bf16.mxu0 0
    %251 = vmatpush1.bf16.msra.mxu0 0
    %252 = vmatprep.subr.bf16.mxu0 0
    %253 = vmatpush1.bf16.msra.mxu0 0
    %254 = vmatprep.subr.bf16.mxu0 0
    %255 = vmatpush1.bf16.msra.mxu0 0
    %256 = vmatprep.subr.bf16.mxu0 0
    %257 = vmatpush1.bf16.msra.mxu0 0
    %258 = vmatprep.subr.bf16.mxu0 0
    %259 = vmatpush1.bf16.msra.mxu0 0
    %260 = vmatprep.subr.bf16.mxu0 0
    %261 = vmatpush1.bf16.msra.mxu0 0
    %262 = vmatprep.subr.bf16.mxu0 0
    %263 = vmatpush1.bf16.msra.mxu0 0
    %264 = vmatprep.mubr.bf16.mxu0 0
    %265 = vmatmul.mubr.bf16.gmra.mrb[0].mxu0 %v95
    %v266 = vpop.f32.mrb[0].mxu0
    %v267 = vadd.f32 0.0, %v266
    %v268 = vpop.f32.mrb[0].mxu0
    %v269 = vpop.f32.mrb[0].mxu0
    %v270 = vadd.f32 0.0, %v269
    %v271 = vpop.f32.mrb[0].mxu0
    %272 = vmatprep.mubr.bf16.mxu0 0
    %273 = vmatmul.mubr.bf16.gmra.mrb[0].mxu0 %v98
    %v274 = vpop.f32.mrb[0].mxu0
    %v275 = vadd.f32 0.0, %v274
    %v276 = vpop.f32.mrb[0].mxu0
    %v277 = vpop.f32.mrb[0].mxu0
    %v278 = vadd.f32 0.0, %v277
    %v279 = vpop.f32.mrb[0].mxu0
    %280 = vdwg.mxu0
    %s281 = scalar_lea.vmem [#allocation5], 48
    %v282 = vld [vmem:[%s281] sm:$0xf]
    %v283 = vld [vmem:[%s281 + $0x4] sm:$0xf]
    %v284 = vld [vmem:[%s281 + $0x8] sm:$0xf]
    %v285 = vld [vmem:[%s281 + $0xc] sm:$0xf]
    %v290 = vunpack.c.l.b16 %v282
    %v291 = vunpack.c.l.b16 %v283
    %v292 = vunpack.c.l.b16 %v284
    %v293 = vunpack.c.l.b16 %v285
    %v294 = vpack.c.b16 %v291, %v290
    %v295 = vpack.c.b16 %v293, %v292
    %298 = vmatprep.subr.bf16.mxu0 0
    %299 = vmatpush1.bf16.msra.mxu0 %v294
    %300 = vmatprep.subr.bf16.mxu0 0
    %301 = vmatpush1.bf16.msra.mxu0 %v295
    %302 = vmatprep.subr.bf16.mxu0 0
    %303 = vmatpush1.bf16.msra.mxu0 0
    %304 = vmatprep.subr.bf16.mxu0 0
    %305 = vmatpush1.bf16.msra.mxu0 0
    %306 = vmatprep.subr.bf16.mxu0 0
    %307 = vmatpush1.bf16.msra.mxu0 0
    %308 = vmatprep.subr.bf16.mxu0 0
    %309 = vmatpush1.bf16.msra.mxu0 0
    %310 = vmatprep.subr.bf16.mxu0 0
    %311 = vmatpush1.bf16.msra.mxu0 0
    %312 = vmatprep.subr.bf16.mxu0 0
    %313 = vmatpush1.bf16.msra.mxu0 0
    %314 = vmatprep.subr.bf16.mxu0 0
    %315 = vmatpush1.bf16.msra.mxu0 0
    %316 = vmatprep.subr.bf16.mxu0 0
    %317 = vmatpush1.bf16.msra.mxu0 0
    %318 = vmatprep.subr.bf16.mxu0 0
    %319 = vmatpush1.bf16.msra.mxu0 0
    %320 = vmatprep.subr.bf16.mxu0 0
    %321 = vmatpush1.bf16.msra.mxu0 0
    %322 = vmatprep.subr.bf16.mxu0 0
    %323 = vmatpush1.bf16.msra.mxu0 0
    %324 = vmatprep.subr.bf16.mxu0 0
    %325 = vmatpush1.bf16.msra.mxu0 0
    %326 = vmatprep.subr.bf16.mxu0 0
    %327 = vmatpush1.bf16.msra.mxu0 0
    %328 = vmatprep.subr.bf16.mxu0 0
    %329 = vmatpush1.bf16.msra.mxu0 0
    %330 = vmatprep.mubr.bf16.mxu0 0
    %331 = vmatmul.mubr.bf16.gmra.mrb[0].mxu0 %v95
    %v332 = vpop.f32.mrb[0].mxu0
    %v333 = vadd.f32 0.0, %v332
    %v334 = vpop.f32.mrb[0].mxu0
    %v335 = vpop.f32.mrb[0].mxu0
    %v336 = vadd.f32 0.0, %v335
    %v337 = vpop.f32.mrb[0].mxu0
    %338 = vmatprep.mubr.bf16.mxu0 0
    %339 = vmatmul.mubr.bf16.gmra.mrb[0].mxu0 %v98
    %v340 = vpop.f32.mrb[0].mxu0
    %v341 = vadd.f32 0.0, %v340
    %v342 = vpop.f32.mrb[0].mxu0
    %v343 = vpop.f32.mrb[0].mxu0
    %v344 = vadd.f32 0.0, %v343
    %v345 = vpop.f32.mrb[0].mxu0
    %346 = vdwg.mxu0
    %v347 = vld [vmem:[%s2] sm:$0x1]
    %vm352 = vcmask 1046528
    %v353 = vrot.slane %v201, 1
    %v354 = vrot.slane %v204, 1
    %v355 = vsel %vm352, %v353, %v354
    %v356 = vrot.slane %v209, 1
    %v357 = vrot.slane %v212, 1
    %v358 = vsel %vm352, %v356, %v357
    %v363 = vadd.f32 %v135, %v355
    %v364 = vadd.f32 %v138, %v354
    %v365 = vadd.f32 %v143, %v358
    %v366 = vadd.f32 %v146, %v357
    %v367 = vsel %vm352, %v364, -inf
    %v368 = vmax.f32 %v363, %v367
    %v369 = vrot.slane %v368, 4
    %v370 = vmax.f32 %v368, %v369
    %v371 = vrot.slane %v370, 2
    %v372 = vmax.f32 %v370, %v371
    %v373 = vrot.slane %v372, 1
    %v374 = vmax.f32 %v372, %v373
    %v375 = vsel %vm352, %v366, -inf
    %v376 = vmax.f32 %v365, %v375
    %v377 = vrot.slane %v376, 4
    %v378 = vmax.f32 %v376, %v377
    %v379 = vrot.slane %v378, 2
    %v380 = vmax.f32 %v378, %v379
    %v381 = vrot.slane %v380, 1
    %v382 = vmax.f32 %v380, %v381
    %v384 = vlaneseq
    %v385 = vshrl.u32 %v384, 7
    %v386 = vsub.s32 0, %v385
    %v387 = vrot.slane %v347, %v386
    %v389 = vadd.f32 %v374, %v387
    %v390 = vadd.f32 %v382, %v387
    %v391 = vmax.f32 %v389, 0.0
    %v392 = vmax.f32 %v390, 0.0
    %v393 = vld [vmem:[#allocation7] sm:$0xff]
    %v394 = vld [vmem:[#allocation7 + $0x8] sm:$0xff]
    %v395 = vld [vmem:[#allocation7 + $0x10] sm:$0xff]
    %v396 = vld [vmem:[#allocation7 + $0x18] sm:$0xff]
    %v397 = vld [vmem:[#allocation7 + $0x20] sm:$0xff]
    %v398 = vld [vmem:[#allocation7 + $0x28] sm:$0xff]
    %v399 = vld [vmem:[#allocation7 + $0x30] sm:$0xff]
    %v400 = vld [vmem:[#allocation7 + $0x38] sm:$0xff]
    %v401 = vld [vmem:[#allocation7 + $0x40] sm:$0xff]
    %v402 = vld [vmem:[#allocation7 + $0x48] sm:$0xff]
    %v403 = vld [vmem:[#allocation7 + $0x50] sm:$0xff]
    %v404 = vld [vmem:[#allocation7 + $0x58] sm:$0xff]
    %v405 = vld [vmem:[#allocation7 + $0x60] sm:$0xff]
    %v406 = vld [vmem:[#allocation7 + $0x68] sm:$0xff]
    %v407 = vld [vmem:[#allocation7 + $0x70] sm:$0xff]
    %v408 = vld [vmem:[#allocation7 + $0x78] sm:$0xff]
    %vm413 = vcmask 1045504
    %v414 = vrot.slane %v267, 2
    %v415 = vrot.slane %v270, 2
    %v416 = vsel %vm413, %v414, %v415
    %v417 = vrot.slane %v275, 2
    %v418 = vrot.slane %v278, 2
    %v419 = vsel %vm413, %v417, %v418
    %v424 = vadd.f32 %v363, %v416
    %v425 = vadd.f32 %v364, %v415
    %v426 = vadd.f32 %v365, %v419
    %v427 = vadd.f32 %v366, %v418
    %v428 = vsel %vm413, %v425, -inf
    %v429 = vmax.f32 %v424, %v428
    %v430 = vrot.slane %v429, 4
    %v431 = vmax.f32 %v429, %v430
    %v432 = vrot.slane %v431, 2
    %v433 = vmax.f32 %v431, %v432
    %v434 = vrot.slane %v433, 1
    %v435 = vmax.f32 %v433, %v434
    %v436 = vsel %vm413, %v427, -inf
    %v437 = vmax.f32 %v426, %v436
    %v438 = vrot.slane %v437, 4
    %v439 = vmax.f32 %v437, %v438
    %v440 = vrot.slane %v439, 2
    %v441 = vmax.f32 %v439, %v440
    %v442 = vrot.slane %v441, 1
    %v443 = vmax.f32 %v441, %v442
    %v444 = vadd.f32 %v435, %v387
    %v445 = vadd.f32 %v443, %v387
    %v446 = vmax.f32 %v444, 0.0
    %v447 = vmax.f32 %v445, 0.0
    %s448 = scalar_lea.vmem [#allocation7], 128
    %v449 = vld [vmem:[%s448] sm:$0xff]
    %v450 = vld [vmem:[%s448 + $0x8] sm:$0xff]
    %v451 = vld [vmem:[%s448 + $0x10] sm:$0xff]
    %v452 = vld [vmem:[%s448 + $0x18] sm:$0xff]
    %v453 = vld [vmem:[%s448 + $0x20] sm:$0xff]
    %v454 = vld [vmem:[%s448 + $0x28] sm:$0xff]
    %v455 = vld [vmem:[%s448 + $0x30] sm:$0xff]
    %v456 = vld [vmem:[%s448 + $0x38] sm:$0xff]
    %v457 = vld [vmem:[%s448 + $0x40] sm:$0xff]
    %v458 = vld [vmem:[%s448 + $0x48] sm:$0xff]
    %v459 = vld [vmem:[%s448 + $0x50] sm:$0xff]
    %v460 = vld [vmem:[%s448 + $0x58] sm:$0xff]
    %v461 = vld [vmem:[%s448 + $0x60] sm:$0xff]
    %v462 = vld [vmem:[%s448 + $0x68] sm:$0xff]
    %v463 = vld [vmem:[%s448 + $0x70] sm:$0xff]
    %v464 = vld [vmem:[%s448 + $0x78] sm:$0xff]
    %v467 = vrot.slane %v447, 7
    %vm468 = vcmask 1041409
    %v469 = vsel %vm468, %v467, %v446
    %471 = vmatprep.subr.mxu0 0.0
    %472 = vmatpush1.msra.mxu0 %v449
    %473 = vmatprep.subr.mxu0 0.0
    %474 = vmatpush1.msra.mxu0 %v450
    %475 = vmatprep.subr.mxu0 0.0
    %476 = vmatpush1.msra.mxu0 %v451
    %477 = vmatprep.subr.mxu0 0.0
    %478 = vmatpush1.msra.mxu0 %v452
    %479 = vmatprep.subr.mxu0 0.0
    %480 = vmatpush1.msra.mxu0 %v453
    %481 = vmatprep.subr.mxu0 0.0
    %482 = vmatpush1.msra.mxu0 %v454
    %483 = vmatprep.subr.mxu0 0.0
    %484 = vmatpush1.msra.mxu0 %v455
    %485 = vmatprep.subr.mxu0 0.0
    %486 = vmatpush1.msra.mxu0 %v456
    %487 = vmatprep.subr.mxu0 0.0
    %488 = vmatpush1.msra.mxu0 %v457
    %489 = vmatprep.subr.mxu0 0.0
    %490 = vmatpush1.msra.mxu0 %v458
    %491 = vmatprep.subr.mxu0 0.0
    %492 = vmatpush1.msra.mxu0 %v459
    %493 = vmatprep.subr.mxu0 0.0
    %494 = vmatpush1.msra.mxu0 %v460
    %495 = vmatprep.subr.mxu0 0.0
    %496 = vmatpush1.msra.mxu0 %v461
    %497 = vmatprep.subr.mxu0 0.0
    %498 = vmatpush1.msra.mxu0 %v462
    %499 = vmatprep.subr.mxu0 0.0
    %500 = vmatpush1.msra.mxu0 %v463
    %501 = vmatprep.subr.mxu0 0.0
    %502 = vmatpush1.msra.mxu0 %v464
    %503 = vmatprep.subr.mxu0 0.0
    %504 = vmatpush1.msra.mxu0 0.0
    %505 = vmatprep.subr.mxu0 0.0
    %506 = vmatpush1.msra.mxu0 0.0
    %507 = vmatprep.subr.mxu0 0.0
    %508 = vmatpush1.msra.mxu0 0.0
    %509 = vmatprep.subr.mxu0 0.0
    %510 = vmatpush1.msra.mxu0 0.0
    %511 = vmatprep.subr.mxu0 0.0
    %512 = vmatpush1.msra.mxu0 0.0
    %513 = vmatprep.subr.mxu0 0.0
    %514 = vmatpush1.msra.mxu0 0.0
    %515 = vmatprep.subr.mxu0 0.0
    %516 = vmatpush1.msra.mxu0 0.0
    %517 = vmatprep.subr.mxu0 0.0
    %518 = vmatpush1.msra.mxu0 0.0
    %519 = vmatprep.subr.mxu0 0.0
    %520 = vmatpush1.msra.mxu0 0.0
    %521 = vmatprep.subr.mxu0 0.0
    %522 = vmatpush1.msra.mxu0 0.0
    %523 = vmatprep.subr.mxu0 0.0
    %524 = vmatpush1.msra.mxu0 0.0
    %525 = vmatprep.subr.mxu0 0.0
    %526 = vmatpush1.msra.mxu0 0.0
    %527 = vmatprep.subr.mxu0 0.0
    %528 = vmatpush1.msra.mxu0 0.0
    %529 = vmatprep.subr.mxu0 0.0
    %530 = vmatpush1.msra.mxu0 0.0
    %531 = vmatprep.subr.mxu0 0.0
    %532 = vmatpush1.msra.mxu0 0.0
    %533 = vmatprep.subr.mxu0 0.0
    %534 = vmatpush1.msra.mxu0 0.0
    %535 = vmatprep.mubr.f32.mxu0 0.0
    %536 = vmatmul.mubr.f32.gmra.mrb[0].mxu0 %v469
    %v537 = vpop.f32.mrb[0].mxu0
    %v538 = vadd.f32 0.0, %v537
    %v539 = vpop.f32.mrb[0].mxu0
    %540 = vdwg.mxu0
    %v543 = vrot.slane %v392, 7
    %v544 = vsel %vm468, %v543, %v391
    %546 = vmatprep.subr.mxu0 0.0
    %547 = vmatpush1.msra.mxu0 %v393
    %548 = vmatprep.subr.mxu0 0.0
    %549 = vmatpush1.msra.mxu0 %v394
    %550 = vmatprep.subr.mxu0 0.0
    %551 = vmatpush1.msra.mxu0 %v395
    %552 = vmatprep.subr.mxu0 0.0
    %553 = vmatpush1.msra.mxu0 %v396
    %554 = vmatprep.subr.mxu0 0.0
    %555 = vmatpush1.msra.mxu0 %v397
    %556 = vmatprep.subr.mxu0 0.0
    %557 = vmatpush1.msra.mxu0 %v398
    %558 = vmatprep.subr.mxu0 0.0
    %559 = vmatpush1.msra.mxu0 %v399
    %560 = vmatprep.subr.mxu0 0.0
    %561 = vmatpush1.msra.mxu0 %v400
    %562 = vmatprep.subr.mxu0 0.0
    %563 = vmatpush1.msra.mxu0 %v401
    %564 = vmatprep.subr.mxu0 0.0
    %565 = vmatpush1.msra.mxu0 %v402
    %566 = vmatprep.subr.mxu0 0.0
    %567 = vmatpush1.msra.mxu0 %v403
    %568 = vmatprep.subr.mxu0 0.0
    %569 = vmatpush1.msra.mxu0 %v404
    %570 = vmatprep.subr.mxu0 0.0
    %571 = vmatpush1.msra.mxu0 %v405
    %572 = vmatprep.subr.mxu0 0.0
    %573 = vmatpush1.msra.mxu0 %v406
    %574 = vmatprep.subr.mxu0 0.0
    %575 = vmatpush1.msra.mxu0 %v407
    %576 = vmatprep.subr.mxu0 0.0
    %577 = vmatpush1.msra.mxu0 %v408
    %578 = vmatprep.subr.mxu0 0.0
    %579 = vmatpush1.msra.mxu0 0.0
    %580 = vmatprep.subr.mxu0 0.0
    %581 = vmatpush1.msra.mxu0 0.0
    %582 = vmatprep.subr.mxu0 0.0
    %583 = vmatpush1.msra.mxu0 0.0
    %584 = vmatprep.subr.mxu0 0.0
    %585 = vmatpush1.msra.mxu0 0.0
    %586 = vmatprep.subr.mxu0 0.0
    %587 = vmatpush1.msra.mxu0 0.0
    %588 = vmatprep.subr.mxu0 0.0
    %589 = vmatpush1.msra.mxu0 0.0
    %590 = vmatprep.subr.mxu0 0.0
    %591 = vmatpush1.msra.mxu0 0.0
    %592 = vmatprep.subr.mxu0 0.0
    %593 = vmatpush1.msra.mxu0 0.0
    %594 = vmatprep.subr.mxu0 0.0
    %595 = vmatpush1.msra.mxu0 0.0
    %596 = vmatprep.subr.mxu0 0.0
    %597 = vmatpush1.msra.mxu0 0.0
    %598 = vmatprep.subr.mxu0 0.0
    %599 = vmatpush1.msra.mxu0 0.0
    %600 = vmatprep.subr.mxu0 0.0
    %601 = vmatpush1.msra.mxu0 0.0
    %602 = vmatprep.subr.mxu0 0.0
    %603 = vmatpush1.msra.mxu0 0.0
    %604 = vmatprep.subr.mxu0 0.0
    %605 = vmatpush1.msra.mxu0 0.0
    %606 = vmatprep.subr.mxu0 0.0
    %607 = vmatpush1.msra.mxu0 0.0
    %608 = vmatprep.subr.mxu0 0.0
    %609 = vmatpush1.msra.mxu0 0.0
    %610 = vmatprep.mubr.f32.mxu0 0.0
    %611 = vmatmul.mubr.f32.gmra.mrb[0].mxu0 %v544
    %v612 = vpop.f32.mrb[0].mxu0
    %v613 = vadd.f32 %v538, %v612
    %v614 = vpop.f32.mrb[0].mxu0
    %615 = vdwg.mxu0
    %vm620 = vcmask 1044480
    %v621 = vrot.slane %v333, 3
    %v622 = vrot.slane %v336, 3
    %v623 = vsel %vm620, %v621, %v622
    %v624 = vrot.slane %v341, 3
    %v625 = vrot.slane %v344, 3
    %v626 = vsel %vm620, %v624, %v625
    %v631 = vadd.f32 %v424, %v623
    %v632 = vadd.f32 %v425, %v622
    %v633 = vadd.f32 %v426, %v626
    %v634 = vadd.f32 %v427, %v625
    %v635 = vsel %vm620, %v632, -inf
    %v636 = vmax.f32 %v631, %v635
    %v637 = vrot.slane %v636, 4
    %v638 = vmax.f32 %v636, %v637
    %v639 = vrot.slane %v638, 2
    %v640 = vmax.f32 %v638, %v639
    %v641 = vrot.slane %v640, 1
    %v642 = vmax.f32 %v640, %v641
    %v643 = vsel %vm620, %v634, -inf
    %v644 = vmax.f32 %v633, %v643
    %v645 = vrot.slane %v644, 4
    %v646 = vmax.f32 %v644, %v645
    %v647 = vrot.slane %v646, 2
    %v648 = vmax.f32 %v646, %v647
    %v649 = vrot.slane %v648, 1
    %v650 = vmax.f32 %v648, %v649
    %v651 = vadd.f32 %v642, %v387
    %v652 = vadd.f32 %v650, %v387
    %v653 = vmax.f32 %v651, 0.0
    %v654 = vmax.f32 %v652, 0.0
    %s655 = scalar_lea.vmem [#allocation7], 256
    %v656 = vld [vmem:[%s655] sm:$0xff]
    %v657 = vld [vmem:[%s655 + $0x8] sm:$0xff]
    %v658 = vld [vmem:[%s655 + $0x10] sm:$0xff]
    %v659 = vld [vmem:[%s655 + $0x18] sm:$0xff]
    %v660 = vld [vmem:[%s655 + $0x20] sm:$0xff]
    %v661 = vld [vmem:[%s655 + $0x28] sm:$0xff]
    %v662 = vld [vmem:[%s655 + $0x30] sm:$0xff]
    %v663 = vld [vmem:[%s655 + $0x38] sm:$0xff]
    %v664 = vld [vmem:[%s655 + $0x40] sm:$0xff]
    %v665 = vld [vmem:[%s655 + $0x48] sm:$0xff]
    %v666 = vld [vmem:[%s655 + $0x50] sm:$0xff]
    %v667 = vld [vmem:[%s655 + $0x58] sm:$0xff]
    %v668 = vld [vmem:[%s655 + $0x60] sm:$0xff]
    %v669 = vld [vmem:[%s655 + $0x68] sm:$0xff]
    %v670 = vld [vmem:[%s655 + $0x70] sm:$0xff]
    %v671 = vld [vmem:[%s655 + $0x78] sm:$0xff]
    %v674 = vrot.slane %v654, 7
    %v675 = vsel %vm468, %v674, %v653
    %677 = vmatprep.subr.mxu0 0.0
    %678 = vmatpush1.msra.mxu0 %v656
    %679 = vmatprep.subr.mxu0 0.0
    %680 = vmatpush1.msra.mxu0 %v657
    %681 = vmatprep.subr.mxu0 0.0
    %682 = vmatpush1.msra.mxu0 %v658
    %683 = vmatprep.subr.mxu0 0.0
    %684 = vmatpush1.msra.mxu0 %v659
    %685 = vmatprep.subr.mxu0 0.0
    %686 = vmatpush1.msra.mxu0 %v660
    %687 = vmatprep.subr.mxu0 0.0
    %688 = vmatpush1.msra.mxu0 %v661
    %689 = vmatprep.subr.mxu0 0.0
    %690 = vmatpush1.msra.mxu0 %v662
    %691 = vmatprep.subr.mxu0 0.0
    %692 = vmatpush1.msra.mxu0 %v663
    %693 = vmatprep.subr.mxu0 0.0
    %694 = vmatpush1.msra.mxu0 %v664
    %695 = vmatprep.subr.mxu0 0.0
    %696 = vmatpush1.msra.mxu0 %v665
    %697 = vmatprep.subr.mxu0 0.0
    %698 = vmatpush1.msra.mxu0 %v666
    %699 = vmatprep.subr.mxu0 0.0
    %700 = vmatpush1.msra.mxu0 %v667
    %701 = vmatprep.subr.mxu0 0.0
    %702 = vmatpush1.msra.mxu0 %v668
    %703 = vmatprep.subr.mxu0 0.0
    %704 = vmatpush1.msra.mxu0 %v669
    %705 = vmatprep.subr.mxu0 0.0
    %706 = vmatpush1.msra.mxu0 %v670
    %707 = vmatprep.subr.mxu0 0.0
    %708 = vmatpush1.msra.mxu0 %v671
    %709 = vmatprep.subr.mxu0 0.0
    %710 = vmatpush1.msra.mxu0 0.0
    %711 = vmatprep.subr.mxu0 0.0
    %712 = vmatpush1.msra.mxu0 0.0
    %713 = vmatprep.subr.mxu0 0.0
    %714 = vmatpush1.msra.mxu0 0.0
    %715 = vmatprep.subr.mxu0 0.0
    %716 = vmatpush1.msra.mxu0 0.0
    %717 = vmatprep.subr.mxu0 0.0
    %718 = vmatpush1.msra.mxu0 0.0
    %719 = vmatprep.subr.mxu0 0.0
    %720 = vmatpush1.msra.mxu0 0.0
    %721 = vmatprep.subr.mxu0 0.0
    %722 = vmatpush1.msra.mxu0 0.0
    %723 = vmatprep.subr.mxu0 0.0
    %724 = vmatpush1.msra.mxu0 0.0
    %725 = vmatprep.subr.mxu0 0.0
    %726 = vmatpush1.msra.mxu0 0.0
    %727 = vmatprep.subr.mxu0 0.0
    %728 = vmatpush1.msra.mxu0 0.0
    %729 = vmatprep.subr.mxu0 0.0
    %730 = vmatpush1.msra.mxu0 0.0
    %731 = vmatprep.subr.mxu0 0.0
    %732 = vmatpush1.msra.mxu0 0.0
    %733 = vmatprep.subr.mxu0 0.0
    %734 = vmatpush1.msra.mxu0 0.0
    %735 = vmatprep.subr.mxu0 0.0
    %736 = vmatpush1.msra.mxu0 0.0
    %737 = vmatprep.subr.mxu0 0.0
    %738 = vmatpush1.msra.mxu0 0.0
    %739 = vmatprep.subr.mxu0 0.0
    %740 = vmatpush1.msra.mxu0 0.0
    %741 = vmatprep.mubr.f32.mxu0 0.0
    %742 = vmatmul.mubr.f32.gmra.mrb[0].mxu0 %v675
    %v743 = vpop.f32.mrb[0].mxu0
    %v744 = vadd.f32 0.0, %v743
    %v745 = vpop.f32.mrb[0].mxu0
    %746 = vdwg.mxu0
    %v747 = vadd.f32 %v613, %v744
    %v748 = vld [vmem:[%s4] sm:$0x1]
    %v750 = vlaneseq
    %v751 = vshrl.u32 %v750, 7
    %v752 = vsub.s32 0, %v751
    %v753 = vrot.slane %v748, %v752
    %v755 = vadd.f32 %v747, %v753
    %756 = vst [vmem:[#allocation8] sm:$0x3] %v755
    // Predicated region
    $region34: #{tpu_custom_call.1} parent=1 // pred_check
      _
    $region35: #{tpu_custom_call.1} parent=1 // pred_check_branch
      %758 = sbr.rel (0) target = $region37
    $region36: #{tpu_custom_call.1} parent=1 // pred_region
      %s760 = ssub.s32 32, 32
      %761 = vsyncadd [#allocation4], %s760
      %s763 = sshll.u32 [#allocation8], 4
      %s764 = int_to_ptr.vmem [resolvable:$true] %s763
      %766 = dma.vmem_to_hbm [thread:$0]  %s764, 32, %s5, [#allocation4]
    $region37: #{tpu_custom_call.1} parent=1 // pred_fallthru
      _
    // Predicated region
    $region38: #{tpu_custom_call.1} parent=1 // pred_check
      _
    $region39: #{tpu_custom_call.1} parent=1 // pred_check_branch
      %768 = sbr.rel (0) target = $region41
    $region40: #{tpu_custom_call.1} parent=1 // pred_region
      %769 = dma.done [#allocation4], 32
    $region41: #{tpu_custom_call.1} parent=1 // pred_fallthru
      _
    %770 = vsyncpa [#allocation3], 1
    %771 = vsyncpa [#allocation6], 1
    %772 = vsyncpa [#allocation4], 1

</llo_original>
